<compile_context>
chip_gen: v5e
topology: v5e:2x2
jax: 0.10.0
libtpu: 0.0.40
codegen_flags: <defaults>
</compile_context>

<pallas_src>
import functools
import math

import jax
import jax.numpy as jnp
from jax.experimental import pallas as pl
from jax.experimental.pallas import tpu as pltpu

LANE = 128
SUBLANE = 8


def _round_up(x, m):
    return (x + m - 1) // m * m


# ----------------------------------------------------------------------------
# Pallas kernel: fused Linear -> ReLU -> Linear -> Sigmoid on one batch tile
# ----------------------------------------------------------------------------
def _vnet_fused_kernel(x_ref, w1_ref, b1_ref, w2_ref, b2_ref, o_ref, *,
                       d_out, approx_sigmoid):
    # (tm, Din) @ (Din, Hp) + (1, Hp) -> ReLU           (MXU + VPU)
    h = (
        jnp.dot(x_ref[...], w1_ref[...], preferred_element_type=jnp.float32)
        + b1_ref[...]
    )
    h = jnp.maximum(h, 0.0)
    # (tm, Hp) @ (Hp, Doutp) + (1, Doutp)               (MXU + VPU)
    logits = (
        jnp.dot(h.astype(w2_ref.dtype), w2_ref[...],
                preferred_element_type=jnp.float32)
        + b2_ref[...]
    )
    # Drop the lane padding BEFORE the store so only real columns hit HBM.
    z = logits[:, :d_out]
    e = jnp.exp(-z)                                     # EUP
    if approx_sigmoid:
        o_ref[...] = pl.reciprocal(1.0 + e, approx=True)   # EUP
    else:
        o_ref[...] = 1.0 / (1.0 + e)


# ----------------------------------------------------------------------------
# Parameter preparation (done once, outside the hot path)
# ----------------------------------------------------------------------------
def init_vnet_params(key, d_in, d_hidden, d_out):
    """PyTorch nn.Linear default init (uniform +/- 1/sqrt(fan_in))."""
    k1, k2, k3, k4 = jax.random.split(key, 4)
    bound1 = 1.0 / math.sqrt(d_in)
    bound2 = 1.0 / math.sqrt(d_hidden)
    return {
        "w1": jax.random.uniform(k1, (d_hidden, d_in), jnp.float32, -bound1, bound1),
        "b1": jax.random.uniform(k2, (d_hidden,), jnp.float32, -bound1, bound1),
        "w2": jax.random.uniform(k3, (d_out, d_hidden), jnp.float32, -bound2, bound2),
        "b2": jax.random.uniform(k4, (d_out,), jnp.float32, -bound2, bound2),
    }


def prepare_vnet_params(params, *, use_bf16=False):
    """Transpose to (in, out) layout, zero-pad out-dims to lane multiples.

    Zero padding is exact: relu(0*x + 0) = 0, and zero rows of W2 contribute
    nothing to the second matmul; padded output columns never reach HBM.
    """
    w1, b1 = params["w1"], params["b1"]  # (H, Din), (H,)
    w2, b2 = params["w2"], params["b2"]  # (Dout, H), (Dout,)
    d_hidden, d_in = w1.shape
    d_out = w2.shape[0]

    hp = _round_up(d_hidden, LANE)
    doutp = _round_up(d_out, LANE)
    cdt = jnp.bfloat16 if use_bf16 else jnp.float32  # matmul-input dtype

    w1_p = jnp.zeros((d_in, hp), jnp.float32).at[:, :d_hidden].set(w1.T).astype(cdt)
    b1_p = jnp.zeros((1, hp), jnp.float32).at[0, :d_hidden].set(b1)
    w2_p = jnp.zeros((hp, doutp), jnp.float32).at[:d_hidden, :d_out].set(w2.T).astype(cdt)
    b2_p = jnp.zeros((1, doutp), jnp.float32).at[0, :d_out].set(b2)

    return {
        "w1_p": w1_p, "b1_p": b1_p, "w2_p": w2_p, "b2_p": b2_p,
        "d_in": d_in, "d_hidden": d_hidden, "d_out": d_out,
        "hp": hp, "doutp": doutp,
    }


# ----------------------------------------------------------------------------
# Batch-tile selection (review opts #2, #3, #5)
# ----------------------------------------------------------------------------
def _pick_batch_tile(B, tm_max=2048):
    """Return (tm, padded_batch).

    * tm is a multiple of 8, at most tm_max.
    * Prefer grid >= 2 steps so both v7x TensorCores get work.
    * Prefer tm that divides round_up(B, 8) exactly so no padding copy of x
      beyond sublane alignment is needed; only if no divisor exists within 2x
      of the cap do we accept padding the batch to a multiple of tm.
    """
    bp8 = _round_up(B, SUBLANE)
    cap = min(tm_max, _round_up(pl.cdiv(bp8, 2), SUBLANE))
    cap = max(cap, SUBLANE)

    t = (cap // SUBLANE) * SUBLANE
    while t >= SUBLANE and t * 2 > cap:
        if bp8 % t == 0:
            return t, bp8
        t -= SUBLANE

    tm = (cap // SUBLANE) * SUBLANE
    return tm, _round_up(bp8, tm)


# ----------------------------------------------------------------------------
# Forward pass
# ----------------------------------------------------------------------------
def vnet_forward(x, prepped, *, tm_max=2048, approx_sigmoid=False):
    """x: (B, d_in) -> sigmoid(relu(x @ W1.T + b1) @ W2.T + b2), shape (B, d_out)."""
    B, d_in = x.shape
    assert d_in == prepped["d_in"], (d_in, prepped["d_in"])
    hp, doutp, d_out = prepped["hp"], prepped["doutp"], prepped["d_out"]
    compute_dtype = prepped["w1_p"].dtype

    tm, bp = _pick_batch_tile(B, tm_max)
    x = x.astype(compute_dtype)
    # Only pad rows when strictly needed (tm is picked to divide round_up(B,8)
    # whenever possible, so this is usually a no-op or a <=7-row tail pad).
    x_p = x if bp == B else jnp.zeros((bp, d_in), compute_dtype).at[:B, :].set(x)

    kernel = functools.partial(
        _vnet_fused_kernel, d_out=d_out, approx_sigmoid=approx_sigmoid)

    out = pl.pallas_call(
        kernel,
        # Output carries only the real d_out columns -> minimal HBM writeback.
        out_shape=jax.ShapeDtypeStruct((bp, d_out), jnp.float32),
        grid=(bp // tm,),
        in_specs=[
            # x: tiled over batch; feature dim is the full array extent.
            pl.BlockSpec((tm, d_in), lambda i: (i, 0)),
            # weights / biases: resident (constant index_map).
            pl.BlockSpec((d_in, hp), lambda i: (0, 0)),
            pl.BlockSpec((1, hp), lambda i: (0, 0)),
            pl.BlockSpec((hp, doutp), lambda i: (0, 0)),
            pl.BlockSpec((1, doutp), lambda i: (0, 0)),
        ],
        # Last dim == full array extent (d_out), so a narrow block is legal.
        out_specs=pl.BlockSpec((tm, d_out), lambda i: (i, 0)),
        compiler_params=pltpu.CompilerParams(
            # Batch axis is independent -> shards across v7x's two TensorCores.
            dimension_semantics=("parallel",),
        ),
    )(x_p, prepped["w1_p"], prepped["b1_p"], prepped["w2_p"], prepped["b2_p"])

    return out if bp == B else out[:B]


# ----------------------------------------------------------------------------
# Self-test
# ----------------------------------------------------------------------------
if __name__ == "__main__":
    key = jax.random.PRNGKey(0)
    pkey, xkey = jax.random.split(key)

    # Small shapes consistent with the module: VNet(input=16, hidden=32, output=1)
    d_in, d_hidden, d_out = 16, 32, 1

    params = init_vnet_params(pkey, d_in, d_hidden, d_out)
    prepped = prepare_vnet_params(params)  # f32 path (matches PyTorch reference)

    def reference(x):
        h = jnp.maximum(x @ params["w1"].T + params["b1"], 0.0)
        return jax.nn.sigmoid(h @ params["w2"].T + params["b2"])

    # aligned single-tile, multi-tile (grid=2), and ragged batch sizes
    for batch in (8, 32, 13):
        xk = jax.random.fold_in(xkey, batch)
        x = jax.random.normal(xk, (batch, d_in), jnp.float32)

        out = vnet_forward(x, prepped)
        jax.block_until_ready(out)

        ref = reference(x)
        assert out.shape == (batch, d_out), out.shape
        err = float(jnp.max(jnp.abs(out - ref)))
        assert jnp.allclose(out, ref, atol=1e-5, rtol=1e-5), (batch, err)

    print("KERNEL_OK")
</pallas_src>

<mosaic_0001>
module attributes {stable_mosaic.version = 11 : i64} {
  func.func @_vnet_fused_kernel(%arg0: i32, %arg1: memref<8x16xf32, #tpu.memory_space<vmem>>, %arg2: memref<16x128xf32, #tpu.memory_space<vmem>>, %arg3: memref<1x128xf32, #tpu.memory_space<vmem>>, %arg4: memref<128x128xf32, #tpu.memory_space<vmem>>, %arg5: memref<1x128xf32, #tpu.memory_space<vmem>>, %arg6: memref<8x1xf32, #tpu.memory_space<vmem>>) attributes {dimension_semantics = [#tpu.dimension_semantics<parallel>], iteration_bounds = array<i64: 1>, scalar_prefetch = 0 : i64, scratch_operands = 0 : i64, tpu.core_type = #tpu.core_type<tc>, window_params = [{transform_indices = @transform_0, window_bounds = array<i64: 8, 16>}, {pipeline_mode = #tpu.pipeline_mode<synchronous>, transform_indices = @transform_1, window_bounds = array<i64: 16, 128>}, {pipeline_mode = #tpu.pipeline_mode<synchronous>, transform_indices = @transform_2, window_bounds = array<i64: 1, 128>}, {pipeline_mode = #tpu.pipeline_mode<synchronous>, transform_indices = @transform_3, window_bounds = array<i64: 128, 128>}, {pipeline_mode = #tpu.pipeline_mode<synchronous>, transform_indices = @transform_4, window_bounds = array<i64: 1, 128>}, {transform_indices = @transform_5, window_bounds = array<i64: 8, 1>}]} {
    %c0 = arith.constant 0 : index
    %c0_0 = arith.constant 0 : index
    %0 = vector.load %arg1[%c0, %c0_0] : memref<8x16xf32, #tpu.memory_space<vmem>>, vector<8x16xf32>
    %c0_1 = arith.constant 0 : index
    %c0_2 = arith.constant 0 : index
    %1 = vector.load %arg2[%c0_1, %c0_2] : memref<16x128xf32, #tpu.memory_space<vmem>>, vector<16x128xf32>
    %cst = arith.constant dense<0.000000e+00> : vector<8x128xf32>
    %2 = tpu.matmul %0, %1, %cst {dimension_numbers = #tpu.dot_dimension_numbers<[1], [0], [0], [1], [0, 0, 1, 1], [], []>} : vector<8x16xf32>, vector<16x128xf32>, vector<8x128xf32> -> vector<8x128xf32>
    %c0_3 = arith.constant 0 : index
    %c0_4 = arith.constant 0 : index
    %3 = vector.load %arg3[%c0_3, %c0_4] : memref<1x128xf32, #tpu.memory_space<vmem>>, vector<1x128xf32>
    %4 = vector.broadcast %3 : vector<1x128xf32> to vector<8x128xf32>
    %5 = arith.addf %2, %4 : vector<8x128xf32>
    %cst_5 = arith.constant 0.000000e+00 : f32
    %6 = vector.broadcast %cst_5 : f32 to vector<8x128xf32>
    %7 = arith.maximumf %5, %6 : vector<8x128xf32>
    %c0_6 = arith.constant 0 : index
    %c0_7 = arith.constant 0 : index
    %8 = vector.load %arg4[%c0_6, %c0_7] : memref<128x128xf32, #tpu.memory_space<vmem>>, vector<128x128xf32>
    %cst_8 = arith.constant dense<0.000000e+00> : vector<8x128xf32>
    %9 = tpu.matmul %7, %8, %cst_8 {dimension_numbers = #tpu.dot_dimension_numbers<[1], [0], [0], [1], [0, 0, 1, 1], [], []>} : vector<8x128xf32>, vector<128x128xf32>, vector<8x128xf32> -> vector<8x128xf32>
    %c0_9 = arith.constant 0 : index
    %c0_10 = arith.constant 0 : index
    %10 = vector.load %arg5[%c0_9, %c0_10] : memref<1x128xf32, #tpu.memory_space<vmem>>, vector<1x128xf32>
    %11 = vector.broadcast %10 : vector<1x128xf32> to vector<8x128xf32>
    %12 = arith.addf %9, %11 : vector<8x128xf32>
    %13 = vector.extract_strided_slice %12 {offsets = [0, 0], sizes = [8, 1], strides = [1, 1]} : vector<8x128xf32> to vector<8x1xf32>
    %cst_11 = arith.constant 0.000000e+00 : f32
    %14 = vector.broadcast %cst_11 : f32 to vector<8x1xf32>
    %15 = arith.subf %14, %13 : vector<8x1xf32>
    %16 = math.exp %15 : vector<8x1xf32>
    %cst_12 = arith.constant 1.000000e+00 : f32
    %17 = vector.broadcast %cst_12 : f32 to vector<8x1xf32>
    %18 = arith.addf %17, %16 : vector<8x1xf32>
    %cst_13 = arith.constant 1.000000e+00 : f32
    %19 = vector.broadcast %cst_13 : f32 to vector<8x1xf32>
    %20 = arith.divf %19, %18 : vector<8x1xf32>
    %c0_14 = arith.constant 0 : index
    %c0_15 = arith.constant 0 : index
    %21 = vector.load %arg6[%c0_14, %c0_15] : memref<8x1xf32, #tpu.memory_space<vmem>>, vector<8x1xf32>
    tpu.vector_store %arg6[%c0_14, %c0_15], %20 {strides = array<i32>} : memref<8x1xf32, #tpu.memory_space<vmem>>, vector<8x1xf32>,
    return
  }
  func.func @transform_0(%arg0: i32) -> (i32, i32) {
    %c0_i32 = arith.constant 0 : i32
    %c0_i32_0 = arith.constant 0 : i32
    return %arg0, %c0_i32 : i32, i32
  }
  func.func @transform_1(%arg0: i32) -> (i32, i32) {
    %c0_i32 = arith.constant 0 : i32
    %c0_i32_0 = arith.constant 0 : i32
    %c0_i32_1 = arith.constant 0 : i32
    return %c0_i32, %c0_i32_0 : i32, i32
  }
  func.func @transform_2(%arg0: i32) -> (i32, i32) {
    %c0_i32 = arith.constant 0 : i32
    %c0_i32_0 = arith.constant 0 : i32
    %c0_i32_1 = arith.constant 0 : i32
    return %c0_i32, %c0_i32_0 : i32, i32
  }
  func.func @transform_3(%arg0: i32) -> (i32, i32) {
    %c0_i32 = arith.constant 0 : i32
    %c0_i32_0 = arith.constant 0 : i32
    %c0_i32_1 = arith.constant 0 : i32
    return %c0_i32, %c0_i32_0 : i32, i32
  }
  func.func @transform_4(%arg0: i32) -> (i32, i32) {
    %c0_i32 = arith.constant 0 : i32
    %c0_i32_0 = arith.constant 0 : i32
    %c0_i32_1 = arith.constant 0 : i32
    return %c0_i32, %c0_i32_0 : i32, i32
  }
  func.func @transform_5(%arg0: i32) -> (i32, i32) {
    %c0_i32 = arith.constant 0 : i32
    %c0_i32_0 = arith.constant 0 : i32
    return %arg0, %c0_i32 : i32, i32
  }
}

</mosaic_0001>

<llo_original>
// kernel: tpu_custom_call.1
$region0: #{tpu_custom_call.1}
  #allocation0 [shape = 'u32[]', space=smem, size = 0x4, offset = 0x4, fixed_abs, tag = 'smem constant byte address 0x4 - core index']
  #allocation1 [shape = 'u32[72,128]{1,0:T(1,128)}', space=vmem, size = 0x9000, scoped, tag = 'internal scratch']
  %s0 = inlined_call_operand.hbm [shape: f32[8,16], index: 0, kind: input, shape index: {}]
  %s1 = inlined_call_operand.hbm [shape: f32[16,128], index: 1, kind: input, shape index: {}]
  %s2 = inlined_call_operand.vmem [shape: f32[1,128], index: 2, kind: input, shape index: {}]
  %s3 = inlined_call_operand.hbm [shape: f32[128,128], index: 3, kind: input, shape index: {}]
  %s4 = inlined_call_operand.vmem [shape: f32[1,128], index: 4, kind: input, shape index: {}]
  %s5 = inlined_call_operand.vmem [shape: f32[8,1], index: 5, kind: output, shape index: {}]
  %s6 = sld [smem:[#allocation0]]
  $region42: #{tpu_custom_call.1} parent=0
    _
  %s8 = ssub.s32 1, %s6
  %s9 = scalar_select 0, %s8, %s6
  $region1: #{tpu_custom_call.1} parent=0
    #allocation2 [shape = 'u8[4096]{0}', space=vmem, size = 0x1000, scoped, tag = 'input window, operand 0, single buffered']
    #allocation3 [shape = 's32[1]{0}', space=sflag, size = 0x4, scoped, tag = 'scoped memory for tpu_custom_call.1']
    #allocation4 [shape = 'u8[8192]{0}', space=vmem, size = 0x2000, scoped, tag = 'input window, operand 1, single buffered']
    #allocation5 [shape = 's32[1]{0}', space=sflag, size = 0x4, scoped, tag = 'scoped memory for tpu_custom_call.1']
    #allocation6 [shape = 'u8[65536]{0}', space=vmem, size = 0x10000, scoped, tag = 'input window, operand 3, single buffered']
    %10 = vsyncpa [#allocation3], 0
    %11 = vsyncpa [#allocation5], 0
    // Predicated region
    $region2: #{tpu_custom_call.1} parent=1 // pred_check
      _
    $region3: #{tpu_custom_call.1} parent=1 // pred_check_branch
      %13 = sbr.rel (0) target = $region5
    $region4: #{tpu_custom_call.1} parent=1 // pred_region
      %15 = vsyncadd [#allocation3], 0
      %s17 = sshll.u32 %s0, 4
      %s18 = int_to_ptr.hbm [resolvable:$true] %s17
      %s19 = sshll.u32 [#allocation2], 4
      %s20 = int_to_ptr.vmem [resolvable:$true] %s19
      %22 = dma.hbm_to_vmem [thread:$0]  %s18, 128, %s20, [#allocation3]
    $region5: #{tpu_custom_call.1} parent=1 // pred_fallthru
      _
    // Predicated region
    $region6: #{tpu_custom_call.1} parent=1 // pred_check
      _
    $region7: #{tpu_custom_call.1} parent=1 // pred_check_branch
      %24 = sbr.rel (0) target = $region9
    $region8: #{tpu_custom_call.1} parent=1 // pred_region
      %26 = vsyncadd [#allocation5], 0
      %s27 = sshll.u32 %s1, 4
      %s28 = int_to_ptr.hbm [resolvable:$true] %s27
      %s29 = sshll.u32 [#allocation4], 4
      %s30 = int_to_ptr.vmem [resolvable:$true] %s29
      %35 = dma.hbm_to_vmem [thread:$0]  %s28, 256, %s30, [#allocation5], 128, 128, 8
    $region9: #{tpu_custom_call.1} parent=1 // pred_fallthru
      _
    // Predicated region
    $region10: #{tpu_custom_call.1} parent=1 // pred_check
      _
    $region11: #{tpu_custom_call.1} parent=1 // pred_check_branch
      %37 = sbr.rel (0) target = $region13
    $region12: #{tpu_custom_call.1} parent=1 // pred_region
      _
    $region13: #{tpu_custom_call.1} parent=1 // pred_fallthru
      _
    // Predicated region
    $region14: #{tpu_custom_call.1} parent=1 // pred_check
      _
    $region15: #{tpu_custom_call.1} parent=1 // pred_check_branch
      %39 = sbr.rel (0) target = $region17
    $region16: #{tpu_custom_call.1} parent=1 // pred_region
      %41 = vsyncadd [#allocation5], 0
      %s42 = sshll.u32 %s3, 4
      %s43 = int_to_ptr.hbm [resolvable:$true] %s42
      %s44 = sshll.u32 [#allocation6], 4
      %s45 = int_to_ptr.vmem [resolvable:$true] %s44
      %50 = dma.hbm_to_vmem [thread:$0]  %s43, 2048, %s45, [#allocation5], 128, 128, 8
    $region17: #{tpu_custom_call.1} parent=1 // pred_fallthru
      _
    // Predicated region
    $region18: #{tpu_custom_call.1} parent=1 // pred_check
      _
    $region19: #{tpu_custom_call.1} parent=1 // pred_check_branch
      %52 = sbr.rel (0) target = $region21
    $region20: #{tpu_custom_call.1} parent=1 // pred_region
      _
    $region21: #{tpu_custom_call.1} parent=1 // pred_fallthru
      _
    // Predicated region
    $region22: #{tpu_custom_call.1} parent=1 // pred_check
      _
    $region23: #{tpu_custom_call.1} parent=1 // pred_check_branch
      %54 = sbr.rel (0) target = $region25
    $region24: #{tpu_custom_call.1} parent=1 // pred_region
      %56 = dma.done [#allocation3], 128
    $region25: #{tpu_custom_call.1} parent=1 // pred_fallthru
      _
    // Predicated region
    $region26: #{tpu_custom_call.1} parent=1 // pred_check
      _
    $region27: #{tpu_custom_call.1} parent=1 // pred_check_branch
      %58 = sbr.rel (0) target = $region29
    $region28: #{tpu_custom_call.1} parent=1 // pred_region
      %60 = dma.done [#allocation5], 256
    $region29: #{tpu_custom_call.1} parent=1 // pred_fallthru
      _
    // Predicated region
    $region30: #{tpu_custom_call.1} parent=1 // pred_check
      _
    $region31: #{tpu_custom_call.1} parent=1 // pred_check_branch
      %62 = sbr.rel (0) target = $region33
    $region32: #{tpu_custom_call.1} parent=1 // pred_region
      %64 = dma.done [#allocation5], 2048
    $region33: #{tpu_custom_call.1} parent=1 // pred_fallthru
      _
    %v65 = vld [vmem:[#allocation2] sm:$0xff]
    %v66 = vld [vmem:[#allocation4] sm:$0xff]
    %v67 = vld [vmem:[#allocation4 + $0x8] sm:$0xff]
    %v68 = vld [vmem:[%s2] sm:$0x1]
    %v70 = vperm.slane %v68, 0
    %vm72 = vcmask 130048
    %v74 = vsel %vm72, %v65, 0
    %76 = vmatpush.msra.mxu0 0.0
    %77 = vmatpush.msra.mxu0 0.0
    %78 = vmatpush.msra.mxu0 0.0
    %79 = vmatpush.msra.mxu0 0.0
    %80 = vmatpush.msra.mxu0 0.0
    %81 = vmatpush.msra.mxu0 0.0
    %82 = vmatpush.msra.mxu0 0.0
    %83 = vmatpush.msra.mxu0 0.0
    %84 = vmatpush.msra.mxu0 0.0
    %85 = vmatpush.msra.mxu0 0.0
    %86 = vmatpush.msra.mxu0 0.0
    %87 = vmatpush.msra.mxu0 0.0
    %88 = vmatpush.msra.mxu0 0.0
    %89 = vmatpush.msra.mxu0 0.0
    %90 = vmatpush.msra.mxu0 %v67
    %91 = vmatpush.msra.mxu0 %v66
    %92 = vmatmul.f32.gmra.mxu0 %v74
    %v93 = vpop.f32.mrf.mxu0
    %v94 = vadd.f32 %v70, %v93
    %95 = vdwg.mxu0
    %v96 = vmax.f32 %v94, 0.0
    %v97 = vld [vmem:[#allocation6] sm:$0xff]
    %v98 = vld [vmem:[#allocation6 + $0x8] sm:$0xff]
    %v99 = vld [vmem:[#allocation6 + $0x10] sm:$0xff]
    %v100 = vld [vmem:[#allocation6 + $0x18] sm:$0xff]
    %v101 = vld [vmem:[#allocation6 + $0x20] sm:$0xff]
    %v102 = vld [vmem:[#allocation6 + $0x28] sm:$0xff]
    %v103 = vld [vmem:[#allocation6 + $0x30] sm:$0xff]
    %v104 = vld [vmem:[#allocation6 + $0x38] sm:$0xff]
    %v105 = vld [vmem:[#allocation6 + $0x40] sm:$0xff]
    %v106 = vld [vmem:[#allocation6 + $0x48] sm:$0xff]
    %v107 = vld [vmem:[#allocation6 + $0x50] sm:$0xff]
    %v108 = vld [vmem:[#allocation6 + $0x58] sm:$0xff]
    %v109 = vld [vmem:[#allocation6 + $0x60] sm:$0xff]
    %v110 = vld [vmem:[#allocation6 + $0x68] sm:$0xff]
    %v111 = vld [vmem:[#allocation6 + $0x70] sm:$0xff]
    %v112 = vld [vmem:[#allocation6 + $0x78] sm:$0xff]
    %v113 = vld [vmem:[%s4] sm:$0x1]
    %v115 = vperm.slane %v113, 0
    %117 = vmatpush.msra.mxu0 %v112
    %118 = vmatpush.msra.mxu0 %v111
    %119 = vmatpush.msra.mxu0 %v110
    %120 = vmatpush.msra.mxu0 %v109
    %121 = vmatpush.msra.mxu0 %v108
    %122 = vmatpush.msra.mxu0 %v107
    %123 = vmatpush.msra.mxu0 %v106
    %124 = vmatpush.msra.mxu0 %v105
    %125 = vmatpush.msra.mxu0 %v104
    %126 = vmatpush.msra.mxu0 %v103
    %127 = vmatpush.msra.mxu0 %v102
    %128 = vmatpush.msra.mxu0 %v101
    %129 = vmatpush.msra.mxu0 %v100
    %130 = vmatpush.msra.mxu0 %v99
    %131 = vmatpush.msra.mxu0 %v98
    %132 = vmatpush.msra.mxu0 %v97
    %133 = vmatmul.f32.gmra.mxu0 %v96
    %v134 = vpop.f32.mrf.mxu0
    %v135 = vadd.f32 %v115, %v134
    %136 = vdwg.mxu0
    %v137 = vsub.f32 0.0, %v135
    %v138 = vmul.f32 %v137, 1.442695
    %v139 = vpow.pop %v138
    %v140 = vadd.f32 %v139, 1.0
    %v141 = vrcp.pop %v140
    %v142 = vmul.f32 %v140, %v141
    %v143 = vsub.f32 1.0, %v142
    %v144 = vmul.f32 %v141, %v143
    %v145 = vadd.f32 %v141, %v144
    %vm146 = vweird.f32 %v140
    %vm147 = vweird.f32 %v141
    %vm148 = vmor %vm146, %vm147
    %v149 = vsel %vm148, %v141, %v145
    %v150 = vand.u32 2147483647, %v140
    %vm151 = vcmp.eq.f32.partialorder %v150, 8.507059e+37
    %v152 = vand.u32 %v140, 2147483648
    %v153 = vor.u32 1.1754944e-38, %v152
    %v154 = vsel %vm151, %v153, %v149
    %v155 = vmul.f32 1.0, %v154
    %vm156 = vcmask 7168
    %157 = vst.msk [vmem:[%s5] sm:$0xff] %vm156, %v155
    // Predicated region
    $region34: #{tpu_custom_call.1} parent=1 // pred_check
      _
    $region35: #{tpu_custom_call.1} parent=1 // pred_check_branch
      %159 = sbr.rel (0) target = $region37
    $region36: #{tpu_custom_call.1} parent=1 // pred_region
      _
    $region37: #{tpu_custom_call.1} parent=1 // pred_fallthru
      _
    // Predicated region
    $region38: #{tpu_custom_call.1} parent=1 // pred_check
      _
    $region39: #{tpu_custom_call.1} parent=1 // pred_check_branch
      %161 = sbr.rel (0) target = $region41
    $region40: #{tpu_custom_call.1} parent=1 // pred_region
      _
    $region41: #{tpu_custom_call.1} parent=1 // pred_fallthru
      _
    %162 = vsyncpa [#allocation3], 1
    %163 = vsyncpa [#allocation5], 1

</llo_original>
